<compile_context>
chip_gen: v7x
topology: tpu7x:2x2x1
jax: 0.10.0
libtpu: 0.0.40
codegen_flags: <defaults>
</compile_context>

<pallas_src>
import jax
import jax.numpy as jnp
from jax.experimental import pallas as pl
from jax.experimental.pallas import tpu as pltpu

K = 3          # kernel_size; both blocks effectively run with dilation=1
OUT_PAD = 128  # classifier output padded to a full 128-lane register


def _round_up(a, b):
    return (a + b - 1) // b * b


# -----------------------------------------------------------------------------
# Kernel
# -----------------------------------------------------------------------------
def tcn_kernel(x_ref,
               w1_ref, b1_ref, w1b_ref, b1b_ref,
               w2_ref, b2_ref, w2b_ref, b2b_ref,
               wc_ref, bc_ref,
               out_ref):
    bt, tp, _ = x_ref.shape
    h0 = w1b_ref.shape[-1]        # hidden width of block 1 (= 64)
    h1 = w2b_ref.shape[-1]        # hidden width of block 2 (= 64)

    def causal_cat(h3):
        # (bt, tp, C) bf16 -> (bt*tp, 3C) bf16, channel blocks [x[t-2]|x[t-1]|x[t]].
        b, t, c = h3.shape
        z2 = jnp.zeros((b, 2, c), h3.dtype)
        z1 = jnp.zeros((b, 1, c), h3.dtype)
        s2 = jnp.concatenate([z2, h3[:, : t - 2, :]], axis=1)
        s1 = jnp.concatenate([z1, h3[:, : t - 1, :]], axis=1)
        return jnp.concatenate([s2, s1, h3], axis=-1).reshape(b * t, 3 * c)

    x3 = x_ref[...]                                    # bf16 (bt, tp, Cin)

    # ---- block 1: conv1 + residual 1x1 fused into one dot (N = 2*h0 = 128) ----
    r1 = jnp.dot(causal_cat(x3), w1_ref[...],
                 preferred_element_type=jnp.float32) + b1_ref[...]      # (rows, 2*h0)
    h = jnp.maximum(r1[:, :h0], 0.0).astype(jnp.bfloat16)
    # TODO(synk): Dropout is identity at inference; stochastic dropout not implemented.
    c2 = jnp.dot(causal_cat(h.reshape(bt, tp, h0)), w1b_ref[...],
                 preferred_element_type=jnp.float32) + b1b_ref[...]     # (rows, h0)
    y1 = jnp.maximum(jnp.maximum(c2, 0.0) + r1[:, h0:], 0.0).astype(jnp.bfloat16)

    # ---- block 2: conv1 + residual 1x1 fused ----
    r2 = jnp.dot(causal_cat(y1.reshape(bt, tp, h0)), w2_ref[...],
                 preferred_element_type=jnp.float32) + b2_ref[...]      # (rows, 2*h1)
    h2 = jnp.maximum(r2[:, :h1], 0.0).astype(jnp.bfloat16)
    c4 = jnp.dot(causal_cat(h2.reshape(bt, tp, h1)), w2b_ref[...],
                 preferred_element_type=jnp.float32) + b2b_ref[...]     # (rows, h1)
    y2 = jnp.maximum(jnp.maximum(c4, 0.0) + r2[:, h1:], 0.0).astype(jnp.bfloat16)

    # ---- classifier 1x1, Cout padded to 128 lanes (lane-dense stores) ----
    logits = jnp.dot(y2, wc_ref[...],
                     preferred_element_type=jnp.float32) + bc_ref[...]  # (rows, 128)
    out_ref[...] = logits.reshape(bt, tp, out_ref.shape[-1]).astype(out_ref.dtype)


# -----------------------------------------------------------------------------
# Parameters
# -----------------------------------------------------------------------------
def _weight_norm(v, g):
    # PyTorch weight_norm with dim=0: per-output-channel norm over (Cin, K).
    norm = jnp.sqrt(jnp.sum(v * v, axis=(1, 2), keepdims=True))
    return g[:, None, None] * v / norm


def init_raw_params(key, char=28, layers=(64, 64), kernel_size=3):
    """Deterministic synthetic parameters in PyTorch-like layout."""
    ks = jax.random.split(key, 20)
    H0, H1 = layers
    return dict(
        v1a=0.01 * jax.random.normal(ks[0], (H0, char, kernel_size), jnp.float32),
        g1a=1.0 + 0.1 * jax.random.normal(ks[1], (H0,), jnp.float32),
        b1a=0.1 * jax.random.normal(ks[2], (H0,), jnp.float32),
        v1b=0.01 * jax.random.normal(ks[3], (H0, H0, kernel_size), jnp.float32),
        g1b=1.0 + 0.1 * jax.random.normal(ks[4], (H0,), jnp.float32),
        b1b=0.1 * jax.random.normal(ks[5], (H0,), jnp.float32),
        wd1=0.01 * jax.random.normal(ks[6], (H0, char, 1), jnp.float32),
        bd1=0.1 * jax.random.normal(ks[7], (H0,), jnp.float32),
        v2a=0.01 * jax.random.normal(ks[8], (H1, H0, kernel_size), jnp.float32),
        g2a=1.0 + 0.1 * jax.random.normal(ks[9], (H1,), jnp.float32),
        b2a=0.1 * jax.random.normal(ks[10], (H1,), jnp.float32),
        v2b=0.01 * jax.random.normal(ks[11], (H1, H1, kernel_size), jnp.float32),
        g2b=1.0 + 0.1 * jax.random.normal(ks[12], (H1,), jnp.float32),
        b2b=0.1 * jax.random.normal(ks[13], (H1,), jnp.float32),
        wd2=0.01 * jax.random.normal(ks[14], (H1, H0, 1), jnp.float32),
        bd2=0.1 * jax.random.normal(ks[15], (H1,), jnp.float32),
        wc=0.05 * jax.random.normal(ks[16], (char, H1, 1), jnp.float32),
        bc=0.1 * jax.random.normal(ks[17], (char,), jnp.float32),
        first=jax.random.uniform(ks[18], (char, 1), jnp.float32),
    )


def pack_params(p):
    """Fold weight_norm, fuse the K=3 taps + residual 1x1, pad classifier to 128."""
    def conv_w(v, g):
        # (Cout, Cin, K) -> (K*Cin, Cout); row block k multiplies x[t-2+k],
        # matching the [shift2 | shift1 | shift0] LHS concat in the kernel.
        w = jnp.transpose(_weight_norm(v, g), (2, 1, 0))
        return w.reshape(v.shape[2] * v.shape[1], v.shape[0])

    def point_w(wd):  # (Cout, Cin, 1) -> (Cin, Cout)
        return jnp.transpose(wd[:, :, 0])

    def fuse_block_first(v, g, b, wd, bd):
        cw = conv_w(v, g)                               # (3*Cin, Cout)
        cin3, cout = cw.shape
        cin = cin3 // 3
        rw = point_w(wd)                                # (Cin, Cout), acts on x[t]
        rw = jnp.concatenate([jnp.zeros((2 * cin, cout), rw.dtype), rw], axis=0)
        w = jnp.concatenate([cw, rw], axis=1)           # (3*Cin, 2*Cout)
        bias = jnp.concatenate([b, bd]).reshape(1, 2 * cout).astype(jnp.float32)
        return w.astype(jnp.bfloat16), bias

    w1, b1 = fuse_block_first(p['v1a'], p['g1a'], p['b1a'], p['wd1'], p['bd1'])
    w1b = conv_w(p['v1b'], p['g1b']).astype(jnp.bfloat16)
    b1b = p['b1b'].reshape(1, -1)
    w2, b2 = fuse_block_first(p['v2a'], p['g2a'], p['b2a'], p['wd2'], p['bd2'])
    w2b = conv_w(p['v2b'], p['g2b']).astype(jnp.bfloat16)
    b2b = p['b2b'].reshape(1, -1)
    # classifier padded from 28 -> 128 output lanes
    wc = point_w(p['wc'])                               # (H1, 28)
    wc = jnp.concatenate(
        [wc, jnp.zeros((wc.shape[0], OUT_PAD - wc.shape[1]), wc.dtype)],
        axis=1).astype(jnp.bfloat16)
    bc = jnp.concatenate(
        [p['bc'], jnp.zeros((OUT_PAD - p['bc'].shape[0],), p['bc'].dtype)]
    ).reshape(1, OUT_PAD)
    return (w1, b1, w1b, b1b, w2, b2, w2b, b2b, wc, bc)


# -----------------------------------------------------------------------------
# Forward wrapper
# -----------------------------------------------------------------------------
def tcn_forward(x_nct, kernel_params, first):
    """x_nct: (N, 28, T) float32 (PyTorch NCT). Returns (N, 28, T+1)."""
    N, C, T = x_nct.shape
    char = first.shape[0]
    if T == 0:
        # empty-sequence branch of TCN.forward: log_softmax(stacked `first`, dim=1)
        batch = jnp.broadcast_to(first[None], (N, char, 1))
        return jax.nn.log_softmax(batch, axis=1)

    # Pad time to a sublane-friendly multiple (zeros at the END: causal conv =>
    # earlier outputs unaffected) and fold batch into the matmul M dimension.
    Tp = _round_up(T, 16)
    # Amortize the ~0.35us per-grid-step overhead: aim for >= ~2048 rows per
    # block, but keep at least 2 grid steps so the "parallel" batch axis can
    # shard across both v7x TensorCores.
    bt = max(1, min(N, pl.cdiv(2048, Tp)))
    if N >= 2:
        bt = min(bt, pl.cdiv(N, 2))
    Np = _round_up(N, bt)
    # TODO(synk): for very large T, add a time-tile grid axis with a 2-row halo
    # instead of loading the full sequence per block (size against v7x 64 MiB VMEM).

    x = jnp.transpose(x_nct, (0, 2, 1)).astype(jnp.bfloat16)          # (N, T, C)
    x = jnp.pad(x, ((0, Np - N), (0, Tp - T), (0, 0)))                # (Np, Tp, C)

    def full_spec(arr):
        nd = arr.ndim
        return pl.BlockSpec(arr.shape, lambda i, _nd=nd: (0,) * _nd)

    in_specs = [pl.BlockSpec((bt, Tp, C), lambda i: (i, 0, 0))]
    in_specs += [full_spec(w) for w in kernel_params]

    out = pl.pallas_call(
        tcn_kernel,
        out_shape=jax.ShapeDtypeStruct((Np, Tp, OUT_PAD), jnp.float32),
        grid_spec=pltpu.PrefetchScalarGridSpec(
            num_scalar_prefetch=0,
            grid=(Np // bt,),
            in_specs=in_specs,
            out_specs=pl.BlockSpec((bt, Tp, OUT_PAD), lambda i: (i, 0, 0)),
        ),
        compiler_params=pltpu.CompilerParams(
            dimension_semantics=("parallel",),
            vmem_limit_bytes=32 * 1024 * 1024,
        ),
    )(x, *kernel_params)

    logits = jnp.transpose(out[:N, :T, :char], (0, 2, 1))             # (N, 28, T)
    batch_first = jnp.broadcast_to(first[None], (N, char, 1))
    return jnp.concatenate([batch_first, logits], axis=2)             # (N, 28, T+1)


# -----------------------------------------------------------------------------
# Pure-JAX reference (mirrors the PyTorch forward) for correctness checking
# -----------------------------------------------------------------------------
def tcn_reference(x_nct, p):
    def causal_conv(h, v, g, b):
        w = _weight_norm(v, g)                                        # (Cout, Cin, K)
        n, t, _ = h.shape
        hp = jnp.pad(h, ((0, 0), (K - 1, 0), (0, 0)))
        out = b[None, None, :]
        for k in range(K):
            out = out + jnp.einsum('ntc,oc->nto', hp[:, k:k + t, :], w[:, :, k])
        return out

    x = jnp.transpose(x_nct, (0, 2, 1)).astype(jnp.float32)           # (N, T, C)
    h = jax.nn.relu(causal_conv(x, p['v1a'], p['g1a'], p['b1a']))
    h = jax.nn.relu(causal_conv(h, p['v1b'], p['g1b'], p['b1b']))
    res = jnp.einsum('ntc,oc->nto', x, p['wd1'][:, :, 0]) + p['bd1']
    y1 = jax.nn.relu(h + res)
    h = jax.nn.relu(causal_conv(y1, p['v2a'], p['g2a'], p['b2a']))
    h = jax.nn.relu(causal_conv(h, p['v2b'], p['g2b'], p['b2b']))
    res = jnp.einsum('ntc,oc->nto', y1, p['wd2'][:, :, 0]) + p['bd2']
    y2 = jax.nn.relu(h + res)
    logits = jnp.einsum('ntc,oc->nto', y2, p['wc'][:, :, 0]) + p['bc']
    out = jnp.transpose(logits, (0, 2, 1))                            # (N, 28, T)
    batch_first = jnp.broadcast_to(p['first'][None],
                                   (x_nct.shape[0], p['first'].shape[0], 1))
    return jnp.concatenate([batch_first, out], axis=2)


if __name__ == "__main__":
    key = jax.random.PRNGKey(0)
    kx, kp = jax.random.split(key)
    N, C, T = 2, 28, 16
    x = jax.random.normal(kx, (N, C, T), jnp.float32)
    raw = init_raw_params(kp)
    kernel_params = pack_params(raw)

    out = tcn_forward(x, kernel_params, raw['first'])
    out = jax.block_until_ready(out)
    assert out.shape == (N, 28, T + 1), out.shape
    assert bool(jnp.all(jnp.isfinite(out)))

    ref = tcn_reference(x, raw)
    err = float(jnp.max(jnp.abs(out - ref)))
    # bf16 operands (f32 accumulation) vs f32 reference => small deviation expected.
    assert err < 6e-2, f"max abs error vs reference = {err}"
    print("KERNEL_OK")
</pallas_src>

<mosaic_0001>
module attributes {stable_mosaic.version = 11 : i64} {
  func.func @tcn_kernel(%arg0: i32, %arg1: memref<1x16x28xbf16, #tpu.memory_space<vmem>>, %arg2: memref<84x128xbf16, #tpu.memory_space<vmem>>, %arg3: memref<1x128xf32, #tpu.memory_space<vmem>>, %arg4: memref<192x64xbf16, #tpu.memory_space<vmem>>, %arg5: memref<1x64xf32, #tpu.memory_space<vmem>>, %arg6: memref<192x128xbf16, #tpu.memory_space<vmem>>, %arg7: memref<1x128xf32, #tpu.memory_space<vmem>>, %arg8: memref<192x64xbf16, #tpu.memory_space<vmem>>, %arg9: memref<1x64xf32, #tpu.memory_space<vmem>>, %arg10: memref<64x128xbf16, #tpu.memory_space<vmem>>, %arg11: memref<1x128xf32, #tpu.memory_space<vmem>>, %arg12: memref<1x16x128xf32, #tpu.memory_space<vmem>>) attributes {dimension_semantics = [#tpu.dimension_semantics<parallel>], iteration_bounds = array<i64: 2>, scalar_prefetch = 0 : i64, scratch_operands = 0 : i64, tpu.core_type = #tpu.core_type<tc>, window_params = [{transform_indices = @transform_0, window_bounds = array<i64: 1, 16, 28>}, {pipeline_mode = #tpu.pipeline_mode<synchronous>, transform_indices = @transform_1, window_bounds = array<i64: 84, 128>}, {pipeline_mode = #tpu.pipeline_mode<synchronous>, transform_indices = @transform_2, window_bounds = array<i64: 1, 128>}, {pipeline_mode = #tpu.pipeline_mode<synchronous>, transform_indices = @transform_3, window_bounds = array<i64: 192, 64>}, {pipeline_mode = #tpu.pipeline_mode<synchronous>, transform_indices = @transform_4, window_bounds = array<i64: 1, 64>}, {pipeline_mode = #tpu.pipeline_mode<synchronous>, transform_indices = @transform_5, window_bounds = array<i64: 192, 128>}, {pipeline_mode = #tpu.pipeline_mode<synchronous>, transform_indices = @transform_6, window_bounds = array<i64: 1, 128>}, {pipeline_mode = #tpu.pipeline_mode<synchronous>, transform_indices = @transform_7, window_bounds = array<i64: 192, 64>}, {pipeline_mode = #tpu.pipeline_mode<synchronous>, transform_indices = @transform_8, window_bounds = array<i64: 1, 64>}, {pipeline_mode = #tpu.pipeline_mode<synchronous>, transform_indices = @transform_9, window_bounds = array<i64: 64, 128>}, {pipeline_mode = #tpu.pipeline_mode<synchronous>, transform_indices = @transform_10, window_bounds = array<i64: 1, 128>}, {transform_indices = @transform_11, window_bounds = array<i64: 1, 16, 128>}]} {
    %c0 = arith.constant 0 : index
    %c0_0 = arith.constant 0 : index
    %c0_1 = arith.constant 0 : index
    %0 = vector.load %arg1[%c0, %c0_0, %c0_1] : memref<1x16x28xbf16, #tpu.memory_space<vmem>>, vector<1x16x28xbf16>
    %cst = arith.constant 0.000000e+00 : bf16
    %1 = vector.broadcast %cst : bf16 to vector<1x2x28xbf16>
    %cst_2 = arith.constant 0.000000e+00 : bf16
    %2 = vector.broadcast %cst_2 : bf16 to vector<1x1x28xbf16>
    %3 = vector.extract_strided_slice %0 {offsets = [0, 0, 0], sizes = [1, 14, 28], strides = [1, 1, 1]} : vector<1x16x28xbf16> to vector<1x14x28xbf16>
    %4 = tpu.concatenate %1, %3 in 1 : vector<1x2x28xbf16>, vector<1x14x28xbf16> -> vector<1x16x28xbf16>
    %5 = vector.extract_strided_slice %0 {offsets = [0, 0, 0], sizes = [1, 15, 28], strides = [1, 1, 1]} : vector<1x16x28xbf16> to vector<1x15x28xbf16>
    %6 = tpu.concatenate %2, %5 in 1 : vector<1x1x28xbf16>, vector<1x15x28xbf16> -> vector<1x16x28xbf16>
    %7 = tpu.concatenate %4, %6, %0 in 2 : vector<1x16x28xbf16>, vector<1x16x28xbf16>, vector<1x16x28xbf16> -> vector<1x16x84xbf16>
    %8 = vector.shape_cast %7 : vector<1x16x84xbf16> to vector<16x84xbf16>
    %c0_3 = arith.constant 0 : index
    %c0_4 = arith.constant 0 : index
    %9 = vector.load %arg2[%c0_3, %c0_4] : memref<84x128xbf16, #tpu.memory_space<vmem>>, vector<84x128xbf16>
    %cst_5 = arith.constant dense<0.000000e+00> : vector<16x128xf32>
    %10 = tpu.matmul %8, %9, %cst_5 {dimension_numbers = #tpu.dot_dimension_numbers<[1], [0], [0], [1], [0, 0, 1, 1], [], []>} : vector<16x84xbf16>, vector<84x128xbf16>, vector<16x128xf32> -> vector<16x128xf32>
    %c0_6 = arith.constant 0 : index
    %c0_7 = arith.constant 0 : index
    %11 = vector.load %arg3[%c0_6, %c0_7] : memref<1x128xf32, #tpu.memory_space<vmem>>, vector<1x128xf32>
    %12 = vector.broadcast %11 : vector<1x128xf32> to vector<16x128xf32>
    %13 = arith.addf %10, %12 : vector<16x128xf32>
    %14 = vector.extract_strided_slice %13 {offsets = [0, 0], sizes = [16, 64], strides = [1, 1]} : vector<16x128xf32> to vector<16x64xf32>
    %cst_8 = arith.constant 0.000000e+00 : f32
    %15 = vector.broadcast %cst_8 : f32 to vector<16x64xf32>
    %16 = arith.maximumf %14, %15 : vector<16x64xf32>
    %17 = arith.truncf %16 : vector<16x64xf32> to vector<16x64xbf16>
    %18 = vector.shape_cast %17 : vector<16x64xbf16> to vector<1x16x64xbf16>
    %cst_9 = arith.constant 0.000000e+00 : bf16
    %19 = vector.broadcast %cst_9 : bf16 to vector<1x2x64xbf16>
    %cst_10 = arith.constant 0.000000e+00 : bf16
    %20 = vector.broadcast %cst_10 : bf16 to vector<1x1x64xbf16>
    %21 = vector.extract_strided_slice %18 {offsets = [0, 0, 0], sizes = [1, 14, 64], strides = [1, 1, 1]} : vector<1x16x64xbf16> to vector<1x14x64xbf16>
    %22 = tpu.concatenate %19, %21 in 1 : vector<1x2x64xbf16>, vector<1x14x64xbf16> -> vector<1x16x64xbf16>
    %23 = vector.extract_strided_slice %18 {offsets = [0, 0, 0], sizes = [1, 15, 64], strides = [1, 1, 1]} : vector<1x16x64xbf16> to vector<1x15x64xbf16>
    %24 = tpu.concatenate %20, %23 in 1 : vector<1x1x64xbf16>, vector<1x15x64xbf16> -> vector<1x16x64xbf16>
    %25 = tpu.concatenate %22, %24, %18 in 2 : vector<1x16x64xbf16>, vector<1x16x64xbf16>, vector<1x16x64xbf16> -> vector<1x16x192xbf16>
    %26 = vector.shape_cast %25 : vector<1x16x192xbf16> to vector<16x192xbf16>
    %c0_11 = arith.constant 0 : index
    %c0_12 = arith.constant 0 : index
    %27 = vector.load %arg4[%c0_11, %c0_12] : memref<192x64xbf16, #tpu.memory_space<vmem>>, vector<192x64xbf16>
    %cst_13 = arith.constant dense<0.000000e+00> : vector<16x64xf32>
    %28 = tpu.matmul %26, %27, %cst_13 {dimension_numbers = #tpu.dot_dimension_numbers<[1], [0], [0], [1], [0, 0, 1, 1], [], []>} : vector<16x192xbf16>, vector<192x64xbf16>, vector<16x64xf32> -> vector<16x64xf32>
    %c0_14 = arith.constant 0 : index
    %c0_15 = arith.constant 0 : index
    %29 = vector.load %arg5[%c0_14, %c0_15] : memref<1x64xf32, #tpu.memory_space<vmem>>, vector<1x64xf32>
    %30 = vector.broadcast %29 : vector<1x64xf32> to vector<16x64xf32>
    %31 = arith.addf %28, %30 : vector<16x64xf32>
    %cst_16 = arith.constant 0.000000e+00 : f32
    %32 = vector.broadcast %cst_16 : f32 to vector<16x64xf32>
    %33 = arith.maximumf %31, %32 : vector<16x64xf32>
    %34 = vector.extract_strided_slice %13 {offsets = [0, 64], sizes = [16, 64], strides = [1, 1]} : vector<16x128xf32> to vector<16x64xf32>
    %35 = arith.addf %33, %34 : vector<16x64xf32>
    %cst_17 = arith.constant 0.000000e+00 : f32
    %36 = vector.broadcast %cst_17 : f32 to vector<16x64xf32>
    %37 = arith.maximumf %35, %36 : vector<16x64xf32>
    %38 = arith.truncf %37 : vector<16x64xf32> to vector<16x64xbf16>
    %39 = vector.shape_cast %38 : vector<16x64xbf16> to vector<1x16x64xbf16>
    %cst_18 = arith.constant 0.000000e+00 : bf16
    %40 = vector.broadcast %cst_18 : bf16 to vector<1x2x64xbf16>
    %cst_19 = arith.constant 0.000000e+00 : bf16
    %41 = vector.broadcast %cst_19 : bf16 to vector<1x1x64xbf16>
    %42 = vector.extract_strided_slice %39 {offsets = [0, 0, 0], sizes = [1, 14, 64], strides = [1, 1, 1]} : vector<1x16x64xbf16> to vector<1x14x64xbf16>
    %43 = tpu.concatenate %40, %42 in 1 : vector<1x2x64xbf16>, vector<1x14x64xbf16> -> vector<1x16x64xbf16>
    %44 = vector.extract_strided_slice %39 {offsets = [0, 0, 0], sizes = [1, 15, 64], strides = [1, 1, 1]} : vector<1x16x64xbf16> to vector<1x15x64xbf16>
    %45 = tpu.concatenate %41, %44 in 1 : vector<1x1x64xbf16>, vector<1x15x64xbf16> -> vector<1x16x64xbf16>
    %46 = tpu.concatenate %43, %45, %39 in 2 : vector<1x16x64xbf16>, vector<1x16x64xbf16>, vector<1x16x64xbf16> -> vector<1x16x192xbf16>
    %47 = vector.shape_cast %46 : vector<1x16x192xbf16> to vector<16x192xbf16>
    %c0_20 = arith.constant 0 : index
    %c0_21 = arith.constant 0 : index
    %48 = vector.load %arg6[%c0_20, %c0_21] : memref<192x128xbf16, #tpu.memory_space<vmem>>, vector<192x128xbf16>
    %cst_22 = arith.constant dense<0.000000e+00> : vector<16x128xf32>
    %49 = tpu.matmul %47, %48, %cst_22 {dimension_numbers = #tpu.dot_dimension_numbers<[1], [0], [0], [1], [0, 0, 1, 1], [], []>} : vector<16x192xbf16>, vector<192x128xbf16>, vector<16x128xf32> -> vector<16x128xf32>
    %c0_23 = arith.constant 0 : index
    %c0_24 = arith.constant 0 : index
    %50 = vector.load %arg7[%c0_23, %c0_24] : memref<1x128xf32, #tpu.memory_space<vmem>>, vector<1x128xf32>
    %51 = vector.broadcast %50 : vector<1x128xf32> to vector<16x128xf32>
    %52 = arith.addf %49, %51 : vector<16x128xf32>
    %53 = vector.extract_strided_slice %52 {offsets = [0, 0], sizes = [16, 64], strides = [1, 1]} : vector<16x128xf32> to vector<16x64xf32>
    %cst_25 = arith.constant 0.000000e+00 : f32
    %54 = vector.broadcast %cst_25 : f32 to vector<16x64xf32>
    %55 = arith.maximumf %53, %54 : vector<16x64xf32>
    %56 = arith.truncf %55 : vector<16x64xf32> to vector<16x64xbf16>
    %57 = vector.shape_cast %56 : vector<16x64xbf16> to vector<1x16x64xbf16>
    %cst_26 = arith.constant 0.000000e+00 : bf16
    %58 = vector.broadcast %cst_26 : bf16 to vector<1x2x64xbf16>
    %cst_27 = arith.constant 0.000000e+00 : bf16
    %59 = vector.broadcast %cst_27 : bf16 to vector<1x1x64xbf16>
    %60 = vector.extract_strided_slice %57 {offsets = [0, 0, 0], sizes = [1, 14, 64], strides = [1, 1, 1]} : vector<1x16x64xbf16> to vector<1x14x64xbf16>
    %61 = tpu.concatenate %58, %60 in 1 : vector<1x2x64xbf16>, vector<1x14x64xbf16> -> vector<1x16x64xbf16>
    %62 = vector.extract_strided_slice %57 {offsets = [0, 0, 0], sizes = [1, 15, 64], strides = [1, 1, 1]} : vector<1x16x64xbf16> to vector<1x15x64xbf16>
    %63 = tpu.concatenate %59, %62 in 1 : vector<1x1x64xbf16>, vector<1x15x64xbf16> -> vector<1x16x64xbf16>
    %64 = tpu.concatenate %61, %63, %57 in 2 : vector<1x16x64xbf16>, vector<1x16x64xbf16>, vector<1x16x64xbf16> -> vector<1x16x192xbf16>
    %65 = vector.shape_cast %64 : vector<1x16x192xbf16> to vector<16x192xbf16>
    %c0_28 = arith.constant 0 : index
    %c0_29 = arith.constant 0 : index
    %66 = vector.load %arg8[%c0_28, %c0_29] : memref<192x64xbf16, #tpu.memory_space<vmem>>, vector<192x64xbf16>
    %cst_30 = arith.constant dense<0.000000e+00> : vector<16x64xf32>
    %67 = tpu.matmul %65, %66, %cst_30 {dimension_numbers = #tpu.dot_dimension_numbers<[1], [0], [0], [1], [0, 0, 1, 1], [], []>} : vector<16x192xbf16>, vector<192x64xbf16>, vector<16x64xf32> -> vector<16x64xf32>
    %c0_31 = arith.constant 0 : index
    %c0_32 = arith.constant 0 : index
    %68 = vector.load %arg9[%c0_31, %c0_32] : memref<1x64xf32, #tpu.memory_space<vmem>>, vector<1x64xf32>
    %69 = vector.broadcast %68 : vector<1x64xf32> to vector<16x64xf32>
    %70 = arith.addf %67, %69 : vector<16x64xf32>
    %cst_33 = arith.constant 0.000000e+00 : f32
    %71 = vector.broadcast %cst_33 : f32 to vector<16x64xf32>
    %72 = arith.maximumf %70, %71 : vector<16x64xf32>
    %73 = vector.extract_strided_slice %52 {offsets = [0, 64], sizes = [16, 64], strides = [1, 1]} : vector<16x128xf32> to vector<16x64xf32>
    %74 = arith.addf %72, %73 : vector<16x64xf32>
    %cst_34 = arith.constant 0.000000e+00 : f32
    %75 = vector.broadcast %cst_34 : f32 to vector<16x64xf32>
    %76 = arith.maximumf %74, %75 : vector<16x64xf32>
    %77 = arith.truncf %76 : vector<16x64xf32> to vector<16x64xbf16>
    %c0_35 = arith.constant 0 : index
    %c0_36 = arith.constant 0 : index
    %78 = vector.load %arg10[%c0_35, %c0_36] : memref<64x128xbf16, #tpu.memory_space<vmem>>, vector<64x128xbf16>
    %cst_37 = arith.constant dense<0.000000e+00> : vector<16x128xf32>
    %79 = tpu.matmul %77, %78, %cst_37 {dimension_numbers = #tpu.dot_dimension_numbers<[1], [0], [0], [1], [0, 0, 1, 1], [], []>} : vector<16x64xbf16>, vector<64x128xbf16>, vector<16x128xf32> -> vector<16x128xf32>
    %c0_38 = arith.constant 0 : index
    %c0_39 = arith.constant 0 : index
    %80 = vector.load %arg11[%c0_38, %c0_39] : memref<1x128xf32, #tpu.memory_space<vmem>>, vector<1x128xf32>
    %81 = vector.broadcast %80 : vector<1x128xf32> to vector<16x128xf32>
    %82 = arith.addf %79, %81 : vector<16x128xf32>
    %83 = vector.shape_cast %82 : vector<16x128xf32> to vector<1x16x128xf32>
    %c0_40 = arith.constant 0 : index
    %c0_41 = arith.constant 0 : index
    %c0_42 = arith.constant 0 : index
    %84 = vector.load %arg12[%c0_40, %c0_41, %c0_42] : memref<1x16x128xf32, #tpu.memory_space<vmem>>, vector<1x16x128xf32>
    tpu.vector_store %arg12[%c0_40, %c0_41, %c0_42], %83 {strides = array<i32>} : memref<1x16x128xf32, #tpu.memory_space<vmem>>, vector<1x16x128xf32>,
    return
  }
  func.func @transform_0(%arg0: i32) -> (i32, i32, i32) {
    %c0_i32 = arith.constant 0 : i32
    %c0_i32_0 = arith.constant 0 : i32
    %c0_i32_1 = arith.constant 0 : i32
    return %arg0, %c0_i32, %c0_i32_0 : i32, i32, i32
  }
  func.func @transform_1(%arg0: i32) -> (i32, i32) {
    %c0_i32 = arith.constant 0 : i32
    %c0_i32_0 = arith.constant 0 : i32
    %c0_i32_1 = arith.constant 0 : i32
    return %c0_i32, %c0_i32_0 : i32, i32
  }
  func.func @transform_2(%arg0: i32) -> (i32, i32) {
    %c0_i32 = arith.constant 0 : i32
    %c0_i32_0 = arith.constant 0 : i32
    %c0_i32_1 = arith.constant 0 : i32
    return %c0_i32, %c0_i32_0 : i32, i32
  }
  func.func @transform_3(%arg0: i32) -> (i32, i32) {
    %c0_i32 = arith.constant 0 : i32
    %c0_i32_0 = arith.constant 0 : i32
    %c0_i32_1 = arith.constant 0 : i32
    return %c0_i32, %c0_i32_0 : i32, i32
  }
  func.func @transform_4(%arg0: i32) -> (i32, i32) {
    %c0_i32 = arith.constant 0 : i32
    %c0_i32_0 = arith.constant 0 : i32
    %c0_i32_1 = arith.constant 0 : i32
    return %c0_i32, %c0_i32_0 : i32, i32
  }
  func.func @transform_5(%arg0: i32) -> (i32, i32) {
    %c0_i32 = arith.constant 0 : i32
    %c0_i32_0 = arith.constant 0 : i32
    %c0_i32_1 = arith.constant 0 : i32
    return %c0_i32, %c0_i32_0 : i32, i32
  }
  func.func @transform_6(%arg0: i32) -> (i32, i32) {
    %c0_i32 = arith.constant 0 : i32
    %c0_i32_0 = arith.constant 0 : i32
    %c0_i32_1 = arith.constant 0 : i32
    return %c0_i32, %c0_i32_0 : i32, i32
  }
  func.func @transform_7(%arg0: i32) -> (i32, i32) {
    %c0_i32 = arith.constant 0 : i32
    %c0_i32_0 = arith.constant 0 : i32
    %c0_i32_1 = arith.constant 0 : i32
    return %c0_i32, %c0_i32_0 : i32, i32
  }
  func.func @transform_8(%arg0: i32) -> (i32, i32) {
    %c0_i32 = arith.constant 0 : i32
    %c0_i32_0 = arith.constant 0 : i32
    %c0_i32_1 = arith.constant 0 : i32
    return %c0_i32, %c0_i32_0 : i32, i32
  }
  func.func @transform_9(%arg0: i32) -> (i32, i32) {
    %c0_i32 = arith.constant 0 : i32
    %c0_i32_0 = arith.constant 0 : i32
    %c0_i32_1 = arith.constant 0 : i32
    return %c0_i32, %c0_i32_0 : i32, i32
  }
  func.func @transform_10(%arg0: i32) -> (i32, i32) {
    %c0_i32 = arith.constant 0 : i32
    %c0_i32_0 = arith.constant 0 : i32
    %c0_i32_1 = arith.constant 0 : i32
    return %c0_i32, %c0_i32_0 : i32, i32
  }
  func.func @transform_11(%arg0: i32) -> (i32, i32, i32) {
    %c0_i32 = arith.constant 0 : i32
    %c0_i32_0 = arith.constant 0 : i32
    %c0_i32_1 = arith.constant 0 : i32
    return %arg0, %c0_i32, %c0_i32_0 : i32, i32, i32
  }
}

</mosaic_0001>

<llo_original>
// kernel: tpu_custom_call.1
$region0: #{tpu_custom_call.1}
  #allocation0 [shape = 'u32[]', space=smem, size = 0x4, offset = 0x4, fixed_abs, tag = 'smem constant byte address 0x4 - core index']
  #allocation1 [shape = 'u32[144,128]{1,0:T(1,128)}', space=vmem, size = 0x12000, scoped, tag = 'internal scratch']
  %s0 = inlined_call_operand.vmem [shape: bf16[2,16,28], index: 0, kind: input, shape index: {}]
  %s1 = inlined_call_operand.vmem [shape: bf16[84,128], index: 1, kind: input, shape index: {}]
  %s2 = inlined_call_operand.vmem [shape: f32[1,128], index: 2, kind: input, shape index: {}]
  %s3 = inlined_call_operand.vmem [shape: bf16[192,64], index: 3, kind: input, shape index: {}]
  %s4 = inlined_call_operand.vmem [shape: f32[1,64], index: 4, kind: input, shape index: {}]
  %s5 = inlined_call_operand.vmem [shape: bf16[192,128], index: 5, kind: input, shape index: {}]
  %s6 = inlined_call_operand.vmem [shape: f32[1,128], index: 6, kind: input, shape index: {}]
  %s7 = inlined_call_operand.vmem [shape: bf16[192,64], index: 7, kind: input, shape index: {}]
  %s8 = inlined_call_operand.vmem [shape: f32[1,64], index: 8, kind: input, shape index: {}]
  %s9 = inlined_call_operand.vmem [shape: bf16[64,128], index: 9, kind: input, shape index: {}]
  %s10 = inlined_call_operand.vmem [shape: f32[1,128], index: 10, kind: input, shape index: {}]
  %s11 = inlined_call_operand.hbm [shape: f32[2,16,128], index: 11, kind: output, shape index: {}]
  %s12 = sld [smem:[#allocation0]]
  $region77: #{tpu_custom_call.1} parent=0
    _
  %s14 = ssub.s32 1, %s12
  %s15 = scalar_select 0, %s14, %s12
  $region1: #{tpu_custom_call.1} parent=0
    #allocation2 [shape = 'u8[16384]{0}', space=vmem, size = 0x4000, scoped, tag = 'output window, operand 0']
    #allocation3 [shape = 's32[2]{0}', space=sflag, size = 0x8, scoped, tag = 'scoped memory for tpu_custom_call.1']
    %16 = vsyncpa [#allocation3], 0
    %s17 = scalar_lea.sflag [#allocation3], 1
    %18 = vsyncpa %s17, 0
    loop: start=0, step=1, limit=4
    $region2: #{tpu_custom_call.1} parent=1 // loop_pre_header
      _
    $region3: #{tpu_custom_call.1} parent=1 // loop_header
      %s20 = sphi 0, %s24
      %p21 = scmp.ge.s32.totalorder %s20, 4
      %s30 = sphi 0, %s32
      %s33 = sphi 0, %s30
      %s34 = sphi 0, %s33
      %s50 = sphi 0, %s34
      %s54 = sphi 0, %s54
      %s56 = sphi 0, %s54
      %s57 = sphi 0, %s56
      %s71 = sphi 0, %s57
      %s75 = sphi 0, %s75
      %s77 = sphi 0, %s75
      %s78 = sphi 0, %s77
      %s92 = sphi 0, %s78
      %s96 = sphi 0, %s96
      %s98 = sphi 0, %s96
      %s99 = sphi 0, %s98
      %s113 = sphi 0, %s99
      %s117 = sphi 0, %s117
      %s119 = sphi 0, %s117
      %s120 = sphi 0, %s119
      %s134 = sphi 0, %s120
      %s138 = sphi 0, %s138
      %s140 = sphi 0, %s138
      %s141 = sphi 0, %s140
      %s155 = sphi 0, %s141
      %s159 = sphi 0, %s159
      %s161 = sphi 0, %s159
      %s162 = sphi 0, %s161
      %s176 = sphi 0, %s162
      %s180 = sphi 0, %s180
      %s182 = sphi 0, %s180
      %s183 = sphi 0, %s182
      %s197 = sphi 0, %s183
      %s201 = sphi 0, %s201
      %s203 = sphi 0, %s201
      %s204 = sphi 0, %s203
      %s218 = sphi 0, %s204
      %s222 = sphi 0, %s222
      %s224 = sphi 0, %s222
      %s225 = sphi 0, %s224
      %s239 = sphi 0, %s225
      %s243 = sphi 0, %s243
      %s245 = sphi 0, %s243
      %s246 = sphi 0, %s245
      %s260 = sphi 0, %s246
      %s266 = sphi 0, %s268
      %s269 = sphi 0, %s266
      %s270 = sphi 0, %s269
      %s286 = sphi 0, %s270
    $region4: #{tpu_custom_call.1} parent=1 // loop_header_branch
      %23 = sbr.rel (%p21) target = $region8
    $region5: #{tpu_custom_call.1} parent=1 // loop_body
      %s25 = ssub.s32 %s20, 1
      %s26 = ssub.s32 %s20, 2
      %s27 = sadd.s32 %s20, 1
      %s28 = ssub.s32 %s20, %s27
      %p29 = scmp.eq.s32.totalorder %s28, 0
      %s31 = sadd.s32 %s30, 1
      %s32 = scalar_select %p29, %s30, %s31
      %p35 = pneg %p29
      %p36 = scmp.eq.s32.totalorder %s20, 1
      %p37 = por %p35, %p36
      %p38 = scmp.ne.s32.totalorder %s30, %s33
      %p39 = scmp.eq.s32.totalorder %s20, 0
      %p40 = por %p38, %p39
      %p41 = scmp.ne.s32.totalorder %s30, %s33
      %p42 = scmp.eq.s32.totalorder %s25, 1
      %p43 = por %p41, %p42
      %p44 = scmp.ne.s32.totalorder %s33, %s34
      %p45 = scmp.eq.s32.totalorder %s25, 0
      %p46 = por %p44, %p45
      %p47 = scmp.ne.s32.totalorder %s33, %s34
      %p48 = scmp.eq.s32.totalorder %s26, 1
      %p49 = por %p47, %p48
      %p51 = scmp.ne.s32.totalorder %s34, %s50
      %p52 = scmp.eq.s32.totalorder %s26, 0
      %p53 = por %p51, %p52
      %s55 = sadd.s32 %s54, 1
      %p58 = scmp.eq.s32.totalorder %s20, 1
      %p59 = scmp.ne.s32.totalorder %s54, %s56
      %p60 = scmp.eq.s32.totalorder %s20, 0
      %p61 = por %p59, %p60
      %p62 = scmp.ne.s32.totalorder %s54, %s56
      %p63 = scmp.eq.s32.totalorder %s25, 1
      %p64 = por %p62, %p63
      %p65 = scmp.ne.s32.totalorder %s56, %s57
      %p66 = scmp.eq.s32.totalorder %s25, 0
      %p67 = por %p65, %p66
      %p68 = scmp.ne.s32.totalorder %s56, %s57
      %p69 = scmp.eq.s32.totalorder %s26, 1
      %p70 = por %p68, %p69
      %p72 = scmp.ne.s32.totalorder %s57, %s71
      %p73 = scmp.eq.s32.totalorder %s26, 0
      %p74 = por %p72, %p73
      %s76 = sadd.s32 %s75, 1
      %p79 = scmp.eq.s32.totalorder %s20, 1
      %p80 = scmp.ne.s32.totalorder %s75, %s77
      %p81 = scmp.eq.s32.totalorder %s20, 0
      %p82 = por %p80, %p81
      %p83 = scmp.ne.s32.totalorder %s75, %s77
      %p84 = scmp.eq.s32.totalorder %s25, 1
      %p85 = por %p83, %p84
      %p86 = scmp.ne.s32.totalorder %s77, %s78
      %p87 = scmp.eq.s32.totalorder %s25, 0
      %p88 = por %p86, %p87
      %p89 = scmp.ne.s32.totalorder %s77, %s78
      %p90 = scmp.eq.s32.totalorder %s26, 1
      %p91 = por %p89, %p90
      %p93 = scmp.ne.s32.totalorder %s78, %s92
      %p94 = scmp.eq.s32.totalorder %s26, 0
      %p95 = por %p93, %p94
      %s97 = sadd.s32 %s96, 1
      %p100 = scmp.eq.s32.totalorder %s20, 1
      %p101 = scmp.ne.s32.totalorder %s96, %s98
      %p102 = scmp.eq.s32.totalorder %s20, 0
      %p103 = por %p101, %p102
      %p104 = scmp.ne.s32.totalorder %s96, %s98
      %p105 = scmp.eq.s32.totalorder %s25, 1
      %p106 = por %p104, %p105
      %p107 = scmp.ne.s32.totalorder %s98, %s99
      %p108 = scmp.eq.s32.totalorder %s25, 0
      %p109 = por %p107, %p108
      %p110 = scmp.ne.s32.totalorder %s98, %s99
      %p111 = scmp.eq.s32.totalorder %s26, 1
      %p112 = por %p110, %p111
      %p114 = scmp.ne.s32.totalorder %s99, %s113
      %p115 = scmp.eq.s32.totalorder %s26, 0
      %p116 = por %p114, %p115
      %s118 = sadd.s32 %s117, 1
      %p121 = scmp.eq.s32.totalorder %s20, 1
      %p122 = scmp.ne.s32.totalorder %s117, %s119
      %p123 = scmp.eq.s32.totalorder %s20, 0
      %p124 = por %p122, %p123
      %p125 = scmp.ne.s32.totalorder %s117, %s119
      %p126 = scmp.eq.s32.totalorder %s25, 1
      %p127 = por %p125, %p126
      %p128 = scmp.ne.s32.totalorder %s119, %s120
      %p129 = scmp.eq.s32.totalorder %s25, 0
      %p130 = por %p128, %p129
      %p131 = scmp.ne.s32.totalorder %s119, %s120
      %p132 = scmp.eq.s32.totalorder %s26, 1
      %p133 = por %p131, %p132
      %p135 = scmp.ne.s32.totalorder %s120, %s134
      %p136 = scmp.eq.s32.totalorder %s26, 0
      %p137 = por %p135, %p136
      %s139 = sadd.s32 %s138, 1
      %p142 = scmp.eq.s32.totalorder %s20, 1
      %p143 = scmp.ne.s32.totalorder %s138, %s140
      %p144 = scmp.eq.s32.totalorder %s20, 0
      %p145 = por %p143, %p144
      %p146 = scmp.ne.s32.totalorder %s138, %s140
      %p147 = scmp.eq.s32.totalorder %s25, 1
      %p148 = por %p146, %p147
      %p149 = scmp.ne.s32.totalorder %s140, %s141
      %p150 = scmp.eq.s32.totalorder %s25, 0
      %p151 = por %p149, %p150
      %p152 = scmp.ne.s32.totalorder %s140, %s141
      %p153 = scmp.eq.s32.totalorder %s26, 1
      %p154 = por %p152, %p153
      %p156 = scmp.ne.s32.totalorder %s141, %s155
      %p157 = scmp.eq.s32.totalorder %s26, 0
      %p158 = por %p156, %p157
      %s160 = sadd.s32 %s159, 1
      %p163 = scmp.eq.s32.totalorder %s20, 1
      %p164 = scmp.ne.s32.totalorder %s159, %s161
      %p165 = scmp.eq.s32.totalorder %s20, 0
      %p166 = por %p164, %p165
      %p167 = scmp.ne.s32.totalorder %s159, %s161
      %p168 = scmp.eq.s32.totalorder %s25, 1
      %p169 = por %p167, %p168
      %p170 = scmp.ne.s32.totalorder %s161, %s162
      %p171 = scmp.eq.s32.totalorder %s25, 0
      %p172 = por %p170, %p171
      %p173 = scmp.ne.s32.totalorder %s161, %s162
      %p174 = scmp.eq.s32.totalorder %s26, 1
      %p175 = por %p173, %p174
      %p177 = scmp.ne.s32.totalorder %s162, %s176
      %p178 = scmp.eq.s32.totalorder %s26, 0
      %p179 = por %p177, %p178
      %s181 = sadd.s32 %s180, 1
      %p184 = scmp.eq.s32.totalorder %s20, 1
      %p185 = scmp.ne.s32.totalorder %s180, %s182
      %p186 = scmp.eq.s32.totalorder %s20, 0
      %p187 = por %p185, %p186
      %p188 = scmp.ne.s32.totalorder %s180, %s182
      %p189 = scmp.eq.s32.totalorder %s25, 1
      %p190 = por %p188, %p189
      %p191 = scmp.ne.s32.totalorder %s182, %s183
      %p192 = scmp.eq.s32.totalorder %s25, 0
      %p193 = por %p191, %p192
      %p194 = scmp.ne.s32.totalorder %s182, %s183
      %p195 = scmp.eq.s32.totalorder %s26, 1
      %p196 = por %p194, %p195
      %p198 = scmp.ne.s32.totalorder %s183, %s197
      %p199 = scmp.eq.s32.totalorder %s26, 0
      %p200 = por %p198, %p199
      %s202 = sadd.s32 %s201, 1
      %p205 = scmp.eq.s32.totalorder %s20, 1
      %p206 = scmp.ne.s32.totalorder %s201, %s203
      %p207 = scmp.eq.s32.totalorder %s20, 0
      %p208 = por %p206, %p207
      %p209 = scmp.ne.s32.totalorder %s201, %s203
      %p210 = scmp.eq.s32.totalorder %s25, 1
      %p211 = por %p209, %p210
      %p212 = scmp.ne.s32.totalorder %s203, %s204
      %p213 = scmp.eq.s32.totalorder %s25, 0
      %p214 = por %p212, %p213
      %p215 = scmp.ne.s32.totalorder %s203, %s204
      %p216 = scmp.eq.s32.totalorder %s26, 1
      %p217 = por %p215, %p216
      %p219 = scmp.ne.s32.totalorder %s204, %s218
      %p220 = scmp.eq.s32.totalorder %s26, 0
      %p221 = por %p219, %p220
      %s223 = sadd.s32 %s222, 1
      %p226 = scmp.eq.s32.totalorder %s20, 1
      %p227 = scmp.ne.s32.totalorder %s222, %s224
      %p228 = scmp.eq.s32.totalorder %s20, 0
      %p229 = por %p227, %p228
      %p230 = scmp.ne.s32.totalorder %s222, %s224
      %p231 = scmp.eq.s32.totalorder %s25, 1
      %p232 = por %p230, %p231
      %p233 = scmp.ne.s32.totalorder %s224, %s225
      %p234 = scmp.eq.s32.totalorder %s25, 0
      %p235 = por %p233, %p234
      %p236 = scmp.ne.s32.totalorder %s224, %s225
      %p237 = scmp.eq.s32.totalorder %s26, 1
      %p238 = por %p236, %p237
      %p240 = scmp.ne.s32.totalorder %s225, %s239
      %p241 = scmp.eq.s32.totalorder %s26, 0
      %p242 = por %p240, %p241
      %s244 = sadd.s32 %s243, 1
      %p247 = scmp.eq.s32.totalorder %s20, 1
      %p248 = scmp.ne.s32.totalorder %s243, %s245
      %p249 = scmp.eq.s32.totalorder %s20, 0
      %p250 = por %p248, %p249
      %p251 = scmp.ne.s32.totalorder %s243, %s245
      %p252 = scmp.eq.s32.totalorder %s25, 1
      %p253 = por %p251, %p252
      %p254 = scmp.ne.s32.totalorder %s245, %s246
      %p255 = scmp.eq.s32.totalorder %s25, 0
      %p256 = por %p254, %p255
      %p257 = scmp.ne.s32.totalorder %s245, %s246
      %p258 = scmp.eq.s32.totalorder %s26, 1
      %p259 = por %p257, %p258
      %p261 = scmp.ne.s32.totalorder %s246, %s260
      %p262 = scmp.eq.s32.totalorder %s26, 0
      %p263 = por %p261, %p262
      %s264 = ssub.s32 %s20, %s27
      %p265 = scmp.eq.s32.totalorder %s264, 0
      %s267 = sadd.s32 %s266, 1
      %s268 = scalar_select %p265, %s266, %s267
      %p271 = pneg %p265
      %p272 = scmp.eq.s32.totalorder %s20, 1
      %p273 = por %p271, %p272
      %p274 = scmp.ne.s32.totalorder %s266, %s269
      %p275 = scmp.eq.s32.totalorder %s20, 0
      %p276 = por %p274, %p275
      %p277 = scmp.ne.s32.totalorder %s266, %s269
      %p278 = scmp.eq.s32.totalorder %s25, 1
      %p279 = por %p277, %p278
      %p280 = scmp.ne.s32.totalorder %s269, %s270
      %p281 = scmp.eq.s32.totalorder %s25, 0
      %p282 = por %p280, %p281
      %p283 = scmp.ne.s32.totalorder %s269, %s270
      %p284 = scmp.eq.s32.totalorder %s26, 1
      %p285 = por %p283, %p284
      %p287 = scmp.ne.s32.totalorder %s270, %s286
      %p288 = scmp.eq.s32.totalorder %s26, 0
      %p289 = por %p287, %p288
      %p290 = scmp.le.s32.totalorder 1, %s20
      %p291 = scmp.lt.s32.totalorder %s20, 3
      %p292 = pnand %p290, %p291
      %p293 = pneg %p292
      // Predicated region
      $region9: #{tpu_custom_call.1} parent=5 // pred_check
        _
      $region10: #{tpu_custom_call.1} parent=5 // pred_check_branch
        %295 = sbr.rel (%p292) target = $region12
      $region11: #{tpu_custom_call.1} parent=5 // pred_region
        %s296 = ssub.s32 %s20, 1
        // Predicated region
        $region13: #{tpu_custom_call.1} parent=11 // pred_check
          %p297 = pneg %p67
        $region14: #{tpu_custom_call.1} parent=11 // pred_check_branch
          %299 = sbr.rel (%p297) target = $region16
        $region15: #{tpu_custom_call.1} parent=11 // pred_region
          _
        $region16: #{tpu_custom_call.1} parent=11 // pred_fallthru
          _
        // Predicated region
        $region17: #{tpu_custom_call.1} parent=11 // pred_check
          %p300 = pneg %p88
        $region18: #{tpu_custom_call.1} parent=11 // pred_check_branch
          %302 = sbr.rel (%p300) target = $region20
        $region19: #{tpu_custom_call.1} parent=11 // pred_region
          _
        $region20: #{tpu_custom_call.1} parent=11 // pred_fallthru
          _
        // Predicated region
        $region21: #{tpu_custom_call.1} parent=11 // pred_check
          %p303 = pneg %p109
        $region22: #{tpu_custom_call.1} parent=11 // pred_check_branch
          %305 = sbr.rel (%p303) target = $region24
        $region23: #{tpu_custom_call.1} parent=11 // pred_region
          _
        $region24: #{tpu_custom_call.1} parent=11 // pred_fallthru
          _
        // Predicated region
        $region25: #{tpu_custom_call.1} parent=11 // pred_check
          %p306 = pneg %p130
        $region26: #{tpu_custom_call.1} parent=11 // pred_check_branch
          %308 = sbr.rel (%p306) target = $region28
        $region27: #{tpu_custom_call.1} parent=11 // pred_region
          _
        $region28: #{tpu_custom_call.1} parent=11 // pred_fallthru
          _
        // Predicated region
        $region29: #{tpu_custom_call.1} parent=11 // pred_check
          %p309 = pneg %p151
        $region30: #{tpu_custom_call.1} parent=11 // pred_check_branch
          %311 = sbr.rel (%p309) target = $region32
        $region31: #{tpu_custom_call.1} parent=11 // pred_region
          _
        $region32: #{tpu_custom_call.1} parent=11 // pred_fallthru
          _
        // Predicated region
        $region33: #{tpu_custom_call.1} parent=11 // pred_check
          %p312 = pneg %p172
        $region34: #{tpu_custom_call.1} parent=11 // pred_check_branch
          %314 = sbr.rel (%p312) target = $region36
        $region35: #{tpu_custom_call.1} parent=11 // pred_region
          _
        $region36: #{tpu_custom_call.1} parent=11 // pred_fallthru
          _
        // Predicated region
        $region37: #{tpu_custom_call.1} parent=11 // pred_check
          %p315 = pneg %p193
        $region38: #{tpu_custom_call.1} parent=11 // pred_check_branch
          %317 = sbr.rel (%p315) target = $region40
        $region39: #{tpu_custom_call.1} parent=11 // pred_region
          _
        $region40: #{tpu_custom_call.1} parent=11 // pred_fallthru
          _
        // Predicated region
        $region41: #{tpu_custom_call.1} parent=11 // pred_check
          %p318 = pneg %p214
        $region42: #{tpu_custom_call.1} parent=11 // pred_check_branch
          %320 = sbr.rel (%p318) target = $region44
        $region43: #{tpu_custom_call.1} parent=11 // pred_region
          _
        $region44: #{tpu_custom_call.1} parent=11 // pred_fallthru
          _
        // Predicated region
        $region45: #{tpu_custom_call.1} parent=11 // pred_check
          %p321 = pneg %p235
        $region46: #{tpu_custom_call.1} parent=11 // pred_check_branch
          %323 = sbr.rel (%p321) target = $region48
        $region47: #{tpu_custom_call.1} parent=11 // pred_region
          _
        $region48: #{tpu_custom_call.1} parent=11 // pred_fallthru
          _
        // Predicated region
        $region49: #{tpu_custom_call.1} parent=11 // pred_check
          %p324 = pneg %p256
        $region50: #{tpu_custom_call.1} parent=11 // pred_check_branch
          %326 = sbr.rel (%p324) target = $region52
        $region51: #{tpu_custom_call.1} parent=11 // pred_region
          _
        $region52: #{tpu_custom_call.1} parent=11 // pred_fallthru
          _
      $region12: #{tpu_custom_call.1} parent=5 // pred_fallthru
        _
      %p327 = scmp.lt.s32.totalorder %s20, 2
      // Predicated region
      $region53: #{tpu_custom_call.1} parent=5 // pred_check
        %p328 = pneg %p327
      $region54: #{tpu_custom_call.1} parent=5 // pred_check_branch
        %330 = sbr.rel (%p328) target = $region56
      $region55: #{tpu_custom_call.1} parent=5 // pred_region
        // Predicated region
        $region57: #{tpu_custom_call.1} parent=55 // pred_check
          %p331 = pneg %p40
        $region58: #{tpu_custom_call.1} parent=55 // pred_check_branch
          %333 = sbr.rel (%p331) target = $region60
        $region59: #{tpu_custom_call.1} parent=55 // pred_region
          %p334 = scmp.lt.s32.totalorder %s20, 1
          %s335 = scalar_select %p334, %s20, 1
          %s336 = smul.addr %s335, 2
          %s337 = smul.addr %s336, 4
          %s338 = scalar_lea.vmem %s0, %s337
        $region60: #{tpu_custom_call.1} parent=55 // pred_fallthru
          _
      $region56: #{tpu_custom_call.1} parent=5 // pred_fallthru
        _
      %p339 = scmp.le.s32.totalorder 1, %s20
      %p340 = scmp.lt.s32.totalorder %s20, 3
      %p341 = pnand %p339, %p340
      %p342 = pneg %p341
      // Predicated region
      $region61: #{tpu_custom_call.1} parent=5 // pred_check
        _
      $region62: #{tpu_custom_call.1} parent=5 // pred_check_branch
        %344 = sbr.rel (%p341) target = $region64
      $region63: #{tpu_custom_call.1} parent=5 // pred_region
        %s345 = ssub.s32 %s20, 1
        %p346 = scmp.lt.s32.totalorder %s25, 1
        %s347 = scalar_select %p346, %s25, 1
        %s348 = smul.addr %s347, 2
        %s349 = smul.addr %s348, 4
        %s350 = scalar_lea.vmem %s0, %s349
        %p351 = pneg %p46
        %p352 = pneg %p43
        %p353 = pneg %p67
        %p354 = pneg %p64
        %p355 = pneg %p88
        %p356 = pneg %p85
        %p357 = pneg %p109
        %p358 = pneg %p106
        %p359 = pneg %p130
        %p360 = pneg %p127
        %p361 = pneg %p151
        %p362 = pneg %p148
        %p363 = pneg %p172
        %p364 = pneg %p169
        %p365 = pneg %p193
        %p366 = pneg %p190
        %p367 = pneg %p214
        %p368 = pneg %p211
        %p369 = pneg %p235
        %p370 = pneg %p232
        %p371 = pneg %p256
        %p372 = pneg %p253
        %p373 = pneg %p282
        %p374 = pneg %p279
        %s375 = sand.u32 %s269, 1
        %s376 = scalar_lea.sflag [#allocation3], %s375
        %s377 = sand.u32 %s269, 1
        %s378 = smul.addr %s377, 16
        %s379 = scalar_lea.vmem [#allocation2], %s378
        %p380 = scmp.lt.s32.totalorder %s25, 1
        %s381 = scalar_select %p380, %s25, 1
        %s382 = smul.addr %s381, 2
        %s383 = smul.addr %s382, 4
        %s384 = scalar_lea.vmem %s0, %s383
        %v386 = vld [vmem:[%s384] sm:$0xf]
        %v387 = vld [vmem:[%s384 + $0x4] sm:$0xf]
        %v390 = vunpack.c.l.b16 %v386
        %v391 = vunpack.c.l.b16 %v387
        %v392 = vpack.c.b16 %v391, %v390
        %v393 = vrot.slane %v392, 7
        %vm394 = vcmask 1040384
        %v397 = vsel %vm394, 0, %v393
        %v399 = vshrl.u32 %v392, 16
        %v401 = vrot.slane %v399, 7
        %v402 = vshll.u32 %v392, 16
        %v404 = vor.u32 %v401, %v402
        %vm406 = vcmask 1040384
        %vm407 = vsmask.f32 256
        %vm408 = vmand %vm406, %vm407
        %v409 = vsel %vm408, 0, %v404
        %411 = vrot.lane.b32.xlu0 %v409, 28
        %v412 = vpop.permute.xlu0 %411
        %413 = vrot.lane.b32.xlu0 %v392, 56
        %v414 = vpop.permute.xlu0 %413
        %vm415 = vcmask 228352
        %v417 = vsel %vm415, %v397, %v412
        %vm418 = vcmask 457728
        %v420 = vsel %vm418, %v417, %v414
        %v421 = vld [vmem:[%s1] sm:$0xf]
        %v422 = vld [vmem:[%s1 + $0x4] sm:$0xf]
        %v423 = vld [vmem:[%s1 + $0x8] sm:$0xf]
        %v424 = vld [vmem:[%s1 + $0xc] sm:$0xf]
        %v425 = vld [vmem:[%s1 + $0x10] sm:$0xf]
        %v426 = vld [vmem:[%s1 + $0x14] sm:$0xf]
        %v427 = vld [vmem:[%s1 + $0x18] sm:$0xf]
        %v428 = vld [vmem:[%s1 + $0x1c] sm:$0xf]
        %v429 = vld [vmem:[%s1 + $0x20] sm:$0xf]
        %v430 = vld [vmem:[%s1 + $0x24] sm:$0xf]
        %v431 = vld [vmem:[%s1 + $0x28] sm:$0x3]
        %v432 = vld [vmem:[%s2] sm:$0x1]
        %v434 = vlaneseq
        %v435 = vshrl.u32 %v434, 7
        %v436 = vsub.s32 0, %v435
        %v437 = vrot.slane %v432, %v436
        %v450 = vunpack.c.l.b16 %v421
        %v451 = vunpack.c.l.b16 %v422
        %v452 = vunpack.c.l.b16 %v423
        %v453 = vunpack.c.l.b16 %v424
        %v454 = vunpack.c.l.b16 %v425
        %v455 = vunpack.c.l.b16 %v426
        %v456 = vunpack.c.l.b16 %v427
        %v457 = vunpack.c.l.b16 %v428
        %v458 = vunpack.c.l.b16 %v429
        %v459 = vunpack.c.l.b16 %v430
        %v460 = vunpack.c.l.b16 %v431
        %v461 = vpack.c.b16 %v451, %v450
        %v462 = vpack.c.b16 %v453, %v452
        %v463 = vpack.c.b16 %v455, %v454
        %v464 = vpack.c.b16 %v457, %v456
        %v465 = vpack.c.b16 %v459, %v458
        %v466 = vpack.c.b16 %v460, %v460
        %vm472 = vcmask 687104
        %v473 = vsel %vm472, %v420, 0
        %vm475 = vcmask 1041408
        %v477 = vsel %vm475, %v466, 0
        %479 = vmatprep.subr.bf16.mxu0 0
        %480 = vmatpush1.bf16.msra.mxu0 %v461
        %481 = vmatprep.subr.bf16.mxu0 0
        %482 = vmatpush1.bf16.msra.mxu0 %v462
        %483 = vmatprep.subr.bf16.mxu0 0
        %484 = vmatpush1.bf16.msra.mxu0 %v463
        %485 = vmatprep.subr.bf16.mxu0 0
        %486 = vmatpush1.bf16.msra.mxu0 %v464
        %487 = vmatprep.subr.bf16.mxu0 0
        %488 = vmatpush1.bf16.msra.mxu0 %v465
        %489 = vmatprep.subr.bf16.mxu0 0
        %490 = vmatpush1.bf16.msra.mxu0 %v477
        %491 = vmatprep.subr.bf16.mxu0 0
        %492 = vmatpush1.bf16.msra.mxu0 0
        %493 = vmatprep.subr.bf16.mxu0 0
        %494 = vmatpush1.bf16.msra.mxu0 0
        %495 = vmatprep.subr.bf16.mxu0 0
        %496 = vmatpush1.bf16.msra.mxu0 0
        %497 = vmatprep.subr.bf16.mxu0 0
        %498 = vmatpush1.bf16.msra.mxu0 0
        %499 = vmatprep.subr.bf16.mxu0 0
        %500 = vmatpush1.bf16.msra.mxu0 0
        %501 = vmatprep.subr.bf16.mxu0 0
        %502 = vmatpush1.bf16.msra.mxu0 0
        %503 = vmatprep.subr.bf16.mxu0 0
        %504 = vmatpush1.bf16.msra.mxu0 0
        %505 = vmatprep.subr.bf16.mxu0 0
        %506 = vmatpush1.bf16.msra.mxu0 0
        %507 = vmatprep.subr.bf16.mxu0 0
        %508 = vmatpush1.bf16.msra.mxu0 0
        %509 = vmatprep.subr.bf16.mxu0 0
        %510 = vmatpush1.bf16.msra.mxu0 0
        %511 = vmatprep.mubr.bf16.mxu0 0
        %512 = vmatmul.mubr.bf16.gmra.mrb[0].mxu0 %v473
        %v513 = vpop.f32.mrb[0].mxu0
        %v514 = vadd.f32 %v437, %v513
        %v515 = vpop.f32.mrb[0].mxu0
        %v516 = vpop.f32.mrb[0].mxu0
        %v517 = vadd.f32 %v437, %v516
        %v518 = vpop.f32.mrb[0].mxu0
        %519 = vdwg.mxu0
        %v520 = vmax.f32 %v514, 0.0
        %v521 = vmax.f32 %v517, 0.0
        %v522 = vpack.c.bf16 %v521, %v520
        %v524 = vrot.slane %v522, 7
        %v526 = vsel %vm394, 0, %v524
        %v528 = vshrl.u32 %v522, 16
        %v530 = vrot.slane %v528, 7
        %v531 = vshll.u32 %v522, 16
        %v533 = vor.u32 %v530, %v531
        %v535 = vsel %vm408, 0, %v533
        %537 = vrot.lane.b32.xlu0 %v535, 64
        %v538 = vpop.permute.xlu0 %537
        %vm539 = vcmask 523264
        %v541 = vsel %vm539, %v526, %v538
        %v543 = vld [vmem:[%s3] sm:$0xf]
        %v544 = vld [vmem:[%s3 + $0x4] sm:$0xf]
        %v545 = vld [vmem:[%s3 + $0x8] sm:$0xf]
        %v546 = vld [vmem:[%s3 + $0xc] sm:$0xf]
        %v547 = vld [vmem:[%s3 + $0x10] sm:$0xf]
        %v548 = vld [vmem:[%s3 + $0x14] sm:$0xf]
        %v549 = vld [vmem:[%s3 + $0x18] sm:$0xf]
        %v550 = vld [vmem:[%s3 + $0x1c] sm:$0xf]
        %v551 = vld [vmem:[%s3 + $0x20] sm:$0xf]
        %v552 = vld [vmem:[%s3 + $0x24] sm:$0xf]
        %v553 = vld [vmem:[%s3 + $0x28] sm:$0xf]
        %v554 = vld [vmem:[%s3 + $0x2c] sm:$0xf]
        %v555 = vld [vmem:[%s3 + $0x30] sm:$0xf]
        %v556 = vld [vmem:[%s3 + $0x34] sm:$0xf]
        %v557 = vld [vmem:[%s3 + $0x38] sm:$0xf]
        %v558 = vld [vmem:[%s3 + $0x3c] sm:$0xf]
        %v559 = vld [vmem:[%s3 + $0x40] sm:$0xf]
        %v560 = vld [vmem:[%s3 + $0x44] sm:$0xf]
        %v561 = vld [vmem:[%s3 + $0x48] sm:$0xf]
        %v562 = vld [vmem:[%s3 + $0x4c] sm:$0xf]
        %v563 = vld [vmem:[%s3 + $0x50] sm:$0xf]
        %v564 = vld [vmem:[%s3 + $0x54] sm:$0xf]
        %v565 = vld [vmem:[%s3 + $0x58] sm:$0xf]
        %v566 = vld [vmem:[%s3 + $0x5c] sm:$0xf]
        %v567 = vld [vmem:[%s4] sm:$0x1]
        %v569 = vlaneseq
        %v570 = vshrl.u32 %v569, 7
        %v571 = vsub.s32 0, %v570
        %v572 = vrot.slane %v567, %v571
        %v598 = vunpack.c.l.b16 %v543
        %v599 = vunpack.c.l.b16 %v544
        %v600 = vunpack.c.l.b16 %v545
        %v601 = vunpack.c.l.b16 %v546
        %v602 = vunpack.c.l.b16 %v547
        %v603 = vunpack.c.l.b16 %v548
        %v604 = vunpack.c.l.b16 %v549
        %v605 = vunpack.c.l.b16 %v550
        %v606 = vunpack.c.l.b16 %v551
        %v607 = vunpack.c.l.b16 %v552
        %v608 = vunpack.c.l.b16 %v553
        %v609 = vunpack.c.l.b16 %v554
        %v610 = vunpack.c.l.b16 %v555
        %v611 = vunpack.c.l.b16 %v556
        %v612 = vunpack.c.l.b16 %v557
        %v613 = vunpack.c.l.b16 %v558
        %v614 = vunpack.c.l.b16 %v559
        %v615 = vunpack.c.l.b16 %v560
        %v616 = vunpack.c.l.b16 %v561
        %v617 = vunpack.c.l.b16 %v562
        %v618 = vunpack.c.l.b16 %v563
        %v619 = vunpack.c.l.b16 %v564
        %v620 = vunpack.c.l.b16 %v565
        %v621 = vunpack.c.l.b16 %v566
        %v622 = vpack.c.b16 %v599, %v598
        %v623 = vpack.c.b16 %v601, %v600
        %v624 = vpack.c.b16 %v603, %v602
        %v625 = vpack.c.b16 %v605, %v604
        %v626 = vpack.c.b16 %v607, %v606
        %v627 = vpack.c.b16 %v609, %v608
        %v628 = vpack.c.b16 %v611, %v610
        %v629 = vpack.c.b16 %v613, %v612
        %v630 = vpack.c.b16 %v615, %v614
        %v631 = vpack.c.b16 %v617, %v616
        %v632 = vpack.c.b16 %v619, %v618
        %v633 = vpack.c.b16 %v621, %v620
        %v646 = vsel %vm539, %v522, 0
        %648 = vmatprep.subr.bf16.mxu0 0
        %649 = vmatpush1.bf16.msra.mxu0 %v622
        %650 = vmatprep.subr.bf16.mxu0 0
        %651 = vmatpush1.bf16.msra.mxu0 %v623
        %652 = vmatprep.subr.bf16.mxu0 0
        %653 = vmatpush1.bf16.msra.mxu0 %v624
        %654 = vmatprep.subr.bf16.mxu0 0
        %655 = vmatpush1.bf16.msra.mxu0 %v625
        %656 = vmatprep.subr.bf16.mxu0 0
        %657 = vmatpush1.bf16.msra.mxu0 %v626
        %658 = vmatprep.subr.bf16.mxu0 0
        %659 = vmatpush1.bf16.msra.mxu0 %v627
        %660 = vmatprep.subr.bf16.mxu0 0
        %661 = vmatpush1.bf16.msra.mxu0 %v628
        %662 = vmatprep.subr.bf16.mxu0 0
        %663 = vmatpush1.bf16.msra.mxu0 %v629
        %664 = vmatprep.subr.bf16.mxu0 0
        %665 = vmatpush1.bf16.msra.mxu0 %v630
        %666 = vmatprep.subr.bf16.mxu0 0
        %667 = vmatpush1.bf16.msra.mxu0 %v631
        %668 = vmatprep.subr.bf16.mxu0 0
        %669 = vmatpush1.bf16.msra.mxu0 %v632
        %670 = vmatprep.subr.bf16.mxu0 0
        %671 = vmatpush1.bf16.msra.mxu0 %v633
        %672 = vmatprep.subr.bf16.mxu0 0
        %673 = vmatpush1.bf16.msra.mxu0 0
        %674 = vmatprep.subr.bf16.mxu0 0
        %675 = vmatpush1.bf16.msra.mxu0 0
        %676 = vmatprep.subr.bf16.mxu0 0
        %677 = vmatpush1.bf16.msra.mxu0 0
        %678 = vmatprep.subr.bf16.mxu0 0
        %679 = vmatpush1.bf16.msra.mxu0 0
        %680 = vmatprep.mubr.bf16.mxu0 %v646
        %681 = vmatmul.mubr.bf16.gmra.mrb[0].mxu0 %v541
        %v682 = vpop.f32.mrb[0].mxu0
        %v683 = vadd.f32 %v572, %v682
        %v684 = vpop.f32.mrb[0].mxu0
        %v685 = vpop.f32.mrb[0].mxu0
        %v686 = vadd.f32 %v572, %v685
        %v687 = vpop.f32.mrb[0].mxu0
        %688 = vdwg.mxu0
        %v689 = vmax.f32 %v683, 0.0
        %v690 = vmax.f32 %v686, 0.0
        %693 = vrot.lane.b32.xlu0 %v514, 64
        %v694 = vpop.permute.xlu0 %693
        %695 = vrot.lane.b32.xlu0 %v517, 64
        %v696 = vpop.permute.xlu0 %695
        %v699 = vadd.f32 %v689, %v694
        %v700 = vadd.f32 %v690, %v696
        %v701 = vmax.f32 %v699, 0.0
        %v702 = vmax.f32 %v700, 0.0
        %v703 = vpack.c.bf16 %v702, %v701
        %v705 = vrot.slane %v703, 7
        %v707 = vsel %vm394, 0, %v705
        %v709 = vshrl.u32 %v703, 16
        %v711 = vrot.slane %v709, 7
        %v712 = vshll.u32 %v703, 16
        %v714 = vor.u32 %v711, %v712
        %v716 = vsel %vm408, 0, %v714
        %718 = vrot.lane.b32.xlu0 %v716, 64
        %v719 = vpop.permute.xlu0 %718
        %v721 = vsel %vm539, %v707, %v719
        %v723 = vld [vmem:[%s5] sm:$0xf]
        %v724 = vld [vmem:[%s5 + $0x4] sm:$0xf]
        %v725 = vld [vmem:[%s5 + $0x8] sm:$0xf]
        %v726 = vld [vmem:[%s5 + $0xc] sm:$0xf]
        %v727 = vld [vmem:[%s5 + $0x10] sm:$0xf]
        %v728 = vld [vmem:[%s5 + $0x14] sm:$0xf]
        %v729 = vld [vmem:[%s5 + $0x18] sm:$0xf]
        %v730 = vld [vmem:[%s5 + $0x1c] sm:$0xf]
        %v731 = vld [vmem:[%s5 + $0x20] sm:$0xf]
        %v732 = vld [vmem:[%s5 + $0x24] sm:$0xf]
        %v733 = vld [vmem:[%s5 + $0x28] sm:$0xf]
        %v734 = vld [vmem:[%s5 + $0x2c] sm:$0xf]
        %v735 = vld [vmem:[%s5 + $0x30] sm:$0xf]
        %v736 = vld [vmem:[%s5 + $0x34] sm:$0xf]
        %v737 = vld [vmem:[%s5 + $0x38] sm:$0xf]
        %v738 = vld [vmem:[%s5 + $0x3c] sm:$0xf]
        %v739 = vld [vmem:[%s5 + $0x40] sm:$0xf]
        %v740 = vld [vmem:[%s5 + $0x44] sm:$0xf]
        %v741 = vld [vmem:[%s5 + $0x48] sm:$0xf]
        %v742 = vld [vmem:[%s5 + $0x4c] sm:$0xf]
        %v743 = vld [vmem:[%s5 + $0x50] sm:$0xf]
        %v744 = vld [vmem:[%s5 + $0x54] sm:$0xf]
        %v745 = vld [vmem:[%s5 + $0x58] sm:$0xf]
        %v746 = vld [vmem:[%s5 + $0x5c] sm:$0xf]
        %v747 = vld [vmem:[%s6] sm:$0x1]
        %v749 = vlaneseq
        %v750 = vshrl.u32 %v749, 7
        %v751 = vsub.s32 0, %v750
        %v752 = vrot.slane %v747, %v751
        %v778 = vunpack.c.l.b16 %v723
        %v779 = vunpack.c.l.b16 %v724
        %v780 = vunpack.c.l.b16 %v725
        %v781 = vunpack.c.l.b16 %v726
        %v782 = vunpack.c.l.b16 %v727
        %v783 = vunpack.c.l.b16 %v728
        %v784 = vunpack.c.l.b16 %v729
        %v785 = vunpack.c.l.b16 %v730
        %v786 = vunpack.c.l.b16 %v731
        %v787 = vunpack.c.l.b16 %v732
        %v788 = vunpack.c.l.b16 %v733
        %v789 = vunpack.c.l.b16 %v734
        %v790 = vunpack.c.l.b16 %v735
        %v791 = vunpack.c.l.b16 %v736
        %v792 = vunpack.c.l.b16 %v737
        %v793 = vunpack.c.l.b16 %v738
        %v794 = vunpack.c.l.b16 %v739
        %v795 = vunpack.c.l.b16 %v740
        %v796 = vunpack.c.l.b16 %v741
        %v797 = vunpack.c.l.b16 %v742
        %v798 = vunpack.c.l.b16 %v743
        %v799 = vunpack.c.l.b16 %v744
        %v800 = vunpack.c.l.b16 %v745
        %v801 = vunpack.c.l.b16 %v746
        %v802 = vpack.c.b16 %v779, %v778
        %v803 = vpack.c.b16 %v781, %v780
        %v804 = vpack.c.b16 %v783, %v782
        %v805 = vpack.c.b16 %v785, %v784
        %v806 = vpack.c.b16 %v787, %v786
        %v807 = vpack.c.b16 %v789, %v788
        %v808 = vpack.c.b16 %v791, %v790
        %v809 = vpack.c.b16 %v793, %v792
        %v810 = vpack.c.b16 %v795, %v794
        %v811 = vpack.c.b16 %v797, %v796
        %v812 = vpack.c.b16 %v799, %v798
        %v813 = vpack.c.b16 %v801, %v800
        %v826 = vsel %vm539, %v703, 0
        %828 = vmatprep.subr.bf16.mxu0 0
        %829 = vmatpush1.bf16.msra.mxu0 %v802
        %830 = vmatprep.subr.bf16.mxu0 0
        %831 = vmatpush1.bf16.msra.mxu0 %v803
        %832 = vmatprep.subr.bf16.mxu0 0
        %833 = vmatpush1.bf16.msra.mxu0 %v804
        %834 = vmatprep.subr.bf16.mxu0 0
        %835 = vmatpush1.bf16.msra.mxu0 %v805
        %836 = vmatprep.subr.bf16.mxu0 0
        %837 = vmatpush1.bf16.msra.mxu0 %v806
        %838 = vmatprep.subr.bf16.mxu0 0
        %839 = vmatpush1.bf16.msra.mxu0 %v807
        %840 = vmatprep.subr.bf16.mxu0 0
        %841 = vmatpush1.bf16.msra.mxu0 %v808
        %842 = vmatprep.subr.bf16.mxu0 0
        %843 = vmatpush1.bf16.msra.mxu0 %v809
        %844 = vmatprep.subr.bf16.mxu0 0
        %845 = vmatpush1.bf16.msra.mxu0 %v810
        %846 = vmatprep.subr.bf16.mxu0 0
        %847 = vmatpush1.bf16.msra.mxu0 %v811
        %848 = vmatprep.subr.bf16.mxu0 0
        %849 = vmatpush1.bf16.msra.mxu0 %v812
        %850 = vmatprep.subr.bf16.mxu0 0
        %851 = vmatpush1.bf16.msra.mxu0 %v813
        %852 = vmatprep.subr.bf16.mxu0 0
        %853 = vmatpush1.bf16.msra.mxu0 0
        %854 = vmatprep.subr.bf16.mxu0 0
        %855 = vmatpush1.bf16.msra.mxu0 0
        %856 = vmatprep.subr.bf16.mxu0 0
        %857 = vmatpush1.bf16.msra.mxu0 0
        %858 = vmatprep.subr.bf16.mxu0 0
        %859 = vmatpush1.bf16.msra.mxu0 0
        %860 = vmatprep.mubr.bf16.mxu0 %v826
        %861 = vmatmul.mubr.bf16.gmra.mrb[0].mxu0 %v721
        %v862 = vpop.f32.mrb[0].mxu0
        %v863 = vadd.f32 %v752, %v862
        %v864 = vpop.f32.mrb[0].mxu0
        %v865 = vpop.f32.mrb[0].mxu0
        %v866 = vadd.f32 %v752, %v865
        %v867 = vpop.f32.mrb[0].mxu0
        %868 = vdwg.mxu0
        %v869 = vmax.f32 %v863, 0.0
        %v870 = vmax.f32 %v866, 0.0
        %v871 = vpack.c.bf16 %v870, %v869
        %v873 = vrot.slane %v871, 7
        %v875 = vsel %vm394, 0, %v873
        %v877 = vshrl.u32 %v871, 16
        %v879 = vrot.slane %v877, 7
        %v880 = vshll.u32 %v871, 16
        %v882 = vor.u32 %v879, %v880
        %v884 = vsel %vm408, 0, %v882
        %886 = vrot.lane.b32.xlu0 %v884, 64
        %v887 = vpop.permute.xlu0 %886
        %v889 = vsel %vm539, %v875, %v887
        %v891 = vld [vmem:[%s7] sm:$0xf]
        %v892 = vld [vmem:[%s7 + $0x4] sm:$0xf]
        %v893 = vld [vmem:[%s7 + $0x8] sm:$0xf]
        %v894 = vld [vmem:[%s7 + $0xc] sm:$0xf]
        %v895 = vld [vmem:[%s7 + $0x10] sm:$0xf]
        %v896 = vld [vmem:[%s7 + $0x14] sm:$0xf]
        %v897 = vld [vmem:[%s7 + $0x18] sm:$0xf]
        %v898 = vld [vmem:[%s7 + $0x1c] sm:$0xf]
        %v899 = vld [vmem:[%s7 + $0x20] sm:$0xf]
        %v900 = vld [vmem:[%s7 + $0x24] sm:$0xf]
        %v901 = vld [vmem:[%s7 + $0x28] sm:$0xf]
        %v902 = vld [vmem:[%s7 + $0x2c] sm:$0xf]
        %v903 = vld [vmem:[%s7 + $0x30] sm:$0xf]
        %v904 = vld [vmem:[%s7 + $0x34] sm:$0xf]
        %v905 = vld [vmem:[%s7 + $0x38] sm:$0xf]
        %v906 = vld [vmem:[%s7 + $0x3c] sm:$0xf]
        %v907 = vld [vmem:[%s7 + $0x40] sm:$0xf]
        %v908 = vld [vmem:[%s7 + $0x44] sm:$0xf]
        %v909 = vld [vmem:[%s7 + $0x48] sm:$0xf]
        %v910 = vld [vmem:[%s7 + $0x4c] sm:$0xf]
        %v911 = vld [vmem:[%s7 + $0x50] sm:$0xf]
        %v912 = vld [vmem:[%s7 + $0x54] sm:$0xf]
        %v913 = vld [vmem:[%s7 + $0x58] sm:$0xf]
        %v914 = vld [vmem:[%s7 + $0x5c] sm:$0xf]
        %v915 = vld [vmem:[%s8] sm:$0x1]
        %v917 = vlaneseq
        %v918 = vshrl.u32 %v917, 7
        %v919 = vsub.s32 0, %v918
        %v920 = vrot.slane %v915, %v919
        %v946 = vunpack.c.l.b16 %v891
        %v947 = vunpack.c.l.b16 %v892
        %v948 = vunpack.c.l.b16 %v893
        %v949 = vunpack.c.l.b16 %v894
        %v950 = vunpack.c.l.b16 %v895
        %v951 = vunpack.c.l.b16 %v896
        %v952 = vunpack.c.l.b16 %v897
        %v953 = vunpack.c.l.b16 %v898
        %v954 = vunpack.c.l.b16 %v899
        %v955 = vunpack.c.l.b16 %v900
        %v956 = vunpack.c.l.b16 %v901
        %v957 = vunpack.c.l.b16 %v902
        %v958 = vunpack.c.l.b16 %v903
        %v959 = vunpack.c.l.b16 %v904
        %v960 = vunpack.c.l.b16 %v905
        %v961 = vunpack.c.l.b16 %v906
        %v962 = vunpack.c.l.b16 %v907
        %v963 = vunpack.c.l.b16 %v908
        %v964 = vunpack.c.l.b16 %v909
        %v965 = vunpack.c.l.b16 %v910
        %v966 = vunpack.c.l.b16 %v911
        %v967 = vunpack.c.l.b16 %v912
        %v968 = vunpack.c.l.b16 %v913
        %v969 = vunpack.c.l.b16 %v914
        %v970 = vpack.c.b16 %v947, %v946
        %v971 = vpack.c.b16 %v949, %v948
        %v972 = vpack.c.b16 %v951, %v950
        %v973 = vpack.c.b16 %v953, %v952
        %v974 = vpack.c.b16 %v955, %v954
        %v975 = vpack.c.b16 %v957, %v956
        %v976 = vpack.c.b16 %v959, %v958
        %v977 = vpack.c.b16 %v961, %v960
        %v978 = vpack.c.b16 %v963, %v962
        %v979 = vpack.c.b16 %v965, %v964
        %v980 = vpack.c.b16 %v967, %v966
        %v981 = vpack.c.b16 %v969, %v968
        %v994 = vsel %vm539, %v871, 0
        %996 = vmatprep.subr.bf16.mxu0 0
        %997 = vmatpush1.bf16.msra.mxu0 %v970
        %998 = vmatprep.subr.bf16.mxu0 0
        %999 = vmatpush1.bf16.msra.mxu0 %v971
        %1000 = vmatprep.subr.bf16.mxu0 0
        %1001 = vmatpush1.bf16.msra.mxu0 %v972
        %1002 = vmatprep.subr.bf16.mxu0 0
        %1003 = vmatpush1.bf16.msra.mxu0 %v973
        %1004 = vmatprep.subr.bf16.mxu0 0
        %1005 = vmatpush1.bf16.msra.mxu0 %v974
        %1006 = vmatprep.subr.bf16.mxu0 0
        %1007 = vmatpush1.bf16.msra.mxu0 %v975
        %1008 = vmatprep.subr.bf16.mxu0 0
        %1009 = vmatpush1.bf16.msra.mxu0 %v976
        %1010 = vmatprep.subr.bf16.mxu0 0
        %1011 = vmatpush1.bf16.msra.mxu0 %v977
        %1012 = vmatprep.subr.bf16.mxu0 0
        %1013 = vmatpush1.bf16.msra.mxu0 %v978
        %1014 = vmatprep.subr.bf16.mxu0 0
        %1015 = vmatpush1.bf16.msra.mxu0 %v979
        %1016 = vmatprep.subr.bf16.mxu0 0
        %1017 = vmatpush1.bf16.msra.mxu0 %v980
        %1018 = vmatprep.subr.bf16.mxu0 0
        %1019 = vmatpush1.bf16.msra.mxu0 %v981
        %1020 = vmatprep.subr.bf16.mxu0 0
        %1021 = vmatpush1.bf16.msra.mxu0 0
        %1022 = vmatprep.subr.bf16.mxu0 0
        %1023 = vmatpush1.bf16.msra.mxu0 0
        %1024 = vmatprep.subr.bf16.mxu0 0
        %1025 = vmatpush1.bf16.msra.mxu0 0
        %1026 = vmatprep.subr.bf16.mxu0 0
        %1027 = vmatpush1.bf16.msra.mxu0 0
        %1028 = vmatprep.mubr.bf16.mxu0 %v994
        %1029 = vmatmul.mubr.bf16.gmra.mrb[0].mxu0 %v889
        %v1030 = vpop.f32.mrb[0].mxu0
        %v1031 = vadd.f32 %v920, %v1030
        %v1032 = vpop.f32.mrb[0].mxu0
        %v1033 = vpop.f32.mrb[0].mxu0
        %v1034 = vadd.f32 %v920, %v1033
        %v1035 = vpop.f32.mrb[0].mxu0
        %1036 = vdwg.mxu0
        %v1037 = vmax.f32 %v1031, 0.0
        %v1038 = vmax.f32 %v1034, 0.0
        %1041 = vrot.lane.b32.xlu0 %v863, 64
        %v1042 = vpop.permute.xlu0 %1041
        %1043 = vrot.lane.b32.xlu0 %v866, 64
        %v1044 = vpop.permute.xlu0 %1043
        %v1047 = vadd.f32 %v1037, %v1042
        %v1048 = vadd.f32 %v1038, %v1044
        %v1049 = vmax.f32 %v1047, 0.0
        %v1050 = vmax.f32 %v1048, 0.0
        %v1051 = vpack.c.bf16 %v1050, %v1049
        %v1052 = vld [vmem:[%s9] sm:$0xf]
        %v1053 = vld [vmem:[%s9 + $0x4] sm:$0xf]
        %v1054 = vld [vmem:[%s9 + $0x8] sm:$0xf]
        %v1055 = vld [vmem:[%s9 + $0xc] sm:$0xf]
        %v1056 = vld [vmem:[%s9 + $0x10] sm:$0xf]
        %v1057 = vld [vmem:[%s9 + $0x14] sm:$0xf]
        %v1058 = vld [vmem:[%s9 + $0x18] sm:$0xf]
        %v1059 = vld [vmem:[%s9 + $0x1c] sm:$0xf]
        %v1060 = vld [vmem:[%s10] sm:$0x1]
        %v1062 = vlaneseq
        %v1063 = vshrl.u32 %v1062, 7
        %v1064 = vsub.s32 0, %v1063
        %v1065 = vrot.slane %v1060, %v1064
        %v1075 = vunpack.c.l.b16 %v1052
        %v1076 = vunpack.c.l.b16 %v1053
        %v1077 = vunpack.c.l.b16 %v1054
        %v1078 = vunpack.c.l.b16 %v1055
        %v1079 = vunpack.c.l.b16 %v1056
        %v1080 = vunpack.c.l.b16 %v1057
        %v1081 = vunpack.c.l.b16 %v1058
        %v1082 = vunpack.c.l.b16 %v1059
        %v1083 = vpack.c.b16 %v1076, %v1075
        %v1084 = vpack.c.b16 %v1078, %v1077
        %v1085 = vpack.c.b16 %v1080, %v1079
        %v1086 = vpack.c.b16 %v1082, %v1081
        %v1092 = vsel %vm539, %v1051, 0
        %1094 = vmatprep.subr.bf16.mxu0 0
        %1095 = vmatpush1.bf16.msra.mxu0 %v1083
        %1096 = vmatprep.subr.bf16.mxu0 0
        %1097 = vmatpush1.bf16.msra.mxu0 %v1084
        %1098 = vmatprep.subr.bf16.mxu0 0
        %1099 = vmatpush1.bf16.msra.mxu0 %v1085
        %1100 = vmatprep.subr.bf16.mxu0 0
        %1101 = vmatpush1.bf16.msra.mxu0 %v1086
        %1102 = vmatprep.subr.bf16.mxu0 0
        %1103 = vmatpush1.bf16.msra.mxu0 0
        %1104 = vmatprep.subr.bf16.mxu0 0
        %1105 = vmatpush1.bf16.msra.mxu0 0
        %1106 = vmatprep.subr.bf16.mxu0 0
        %1107 = vmatpush1.bf16.msra.mxu0 0
        %1108 = vmatprep.subr.bf16.mxu0 0
        %1109 = vmatpush1.bf16.msra.mxu0 0
        %1110 = vmatprep.subr.bf16.mxu0 0
        %1111 = vmatpush1.bf16.msra.mxu0 0
        %1112 = vmatprep.subr.bf16.mxu0 0
        %1113 = vmatpush1.bf16.msra.mxu0 0
        %1114 = vmatprep.subr.bf16.mxu0 0
        %1115 = vmatpush1.bf16.msra.mxu0 0
        %1116 = vmatprep.subr.bf16.mxu0 0
        %1117 = vmatpush1.bf16.msra.mxu0 0
        %1118 = vmatprep.subr.bf16.mxu0 0
        %1119 = vmatpush1.bf16.msra.mxu0 0
        %1120 = vmatprep.subr.bf16.mxu0 0
        %1121 = vmatpush1.bf16.msra.mxu0 0
        %1122 = vmatprep.subr.bf16.mxu0 0
        %1123 = vmatpush1.bf16.msra.mxu0 0
        %1124 = vmatprep.subr.bf16.mxu0 0
        %1125 = vmatpush1.bf16.msra.mxu0 0
        %1126 = vmatprep.mubr.bf16.mxu0 0
        %1127 = vmatmul.mubr.bf16.gmra.mrb[0].mxu0 %v1092
        %v1128 = vpop.f32.mrb[0].mxu0
        %v1129 = vadd.f32 %v1065, %v1128
        %v1130 = vpop.f32.mrb[0].mxu0
        %v1131 = vpop.f32.mrb[0].mxu0
        %v1132 = vadd.f32 %v1065, %v1131
        %v1133 = vpop.f32.mrb[0].mxu0
        %1134 = vdwg.mxu0
        %1135 = vst [vmem:[%s379] sm:$0xff] %v1129
        %1136 = vst [vmem:[%s379 + $0x8] sm:$0xff] %v1132
        %s1137 = sand.u32 %s269, 1
        %s1138 = scalar_lea.sflag [#allocation3], %s1137
        %s1139 = sand.u32 %s269, 1
        %s1140 = smul.addr %s1139, 16
        %s1141 = scalar_lea.vmem [#allocation2], %s1140
        // Predicated region
        $region65: #{tpu_custom_call.1} parent=63 // pred_check
          %p1142 = pneg %p279
        $region66: #{tpu_custom_call.1} parent=63 // pred_check_branch
          %1144 = sbr.rel (%p1142) target = $region68
        $region67: #{tpu_custom_call.1} parent=63 // pred_region
          %s1146 = ssub.s32 256, 256
          %1147 = vsyncadd %s1138, %s1146
          %s1148 = smul.addr %s25, 2
          %s1149 = smul.addr %s1148, 128
          %s1150 = scalar_lea.hbm %s11, %s1149
          %s1151 = sshll.u32 %s1141, 4
          %s1152 = int_to_ptr.vmem [resolvable:$true] %s1151
          %1157 = dma.vmem_to_hbm [thread:$0]  %s1152, 256, %s1150, %s1138, 128, 128, 8
        $region68: #{tpu_custom_call.1} parent=63 // pred_fallthru
          _
      $region64: #{tpu_custom_call.1} parent=5 // pred_fallthru
        _
      %p1158 = scmp.le.s32.totalorder 2, %s20
      // Predicated region
      $region69: #{tpu_custom_call.1} parent=5 // pred_check
        %p1159 = pneg %p1158
      $region70: #{tpu_custom_call.1} parent=5 // pred_check_branch
        %1161 = sbr.rel (%p1159) target = $region72
      $region71: #{tpu_custom_call.1} parent=5 // pred_region
        %s1162 = ssub.s32 %s20, 2
        // Predicated region
        $region73: #{tpu_custom_call.1} parent=71 // pred_check
          %p1163 = pneg %p285
        $region74: #{tpu_custom_call.1} parent=71 // pred_check_branch
          %1165 = sbr.rel (%p1163) target = $region76
        $region75: #{tpu_custom_call.1} parent=71 // pred_region
          %s1166 = sand.u32 %s270, 1
          %s1167 = scalar_lea.sflag [#allocation3], %s1166
          %s1168 = sand.u32 %s270, 1
          %s1169 = smul.addr %s1168, 16
          %s1170 = scalar_lea.vmem [#allocation2], %s1169
          %1171 = dma.done %s1167, 256
        $region76: #{tpu_custom_call.1} parent=71 // pred_fallthru
          _
      $region72: #{tpu_custom_call.1} parent=5 // pred_fallthru
        _
    $region6: #{tpu_custom_call.1} parent=1 // loop_footer
      %s24 = sadd.s32 1, %s20
    $region7: #{tpu_custom_call.1} parent=1 // loop_footer_branch
      %19 = sbr.rel target = $region3
    $region8: #{tpu_custom_call.1} parent=1 // loop_exit
      _
    %1172 = vsyncpa [#allocation3], 1
    %s1173 = scalar_lea.sflag [#allocation3], 1
    %1174 = vsyncpa %s1173, 1

</llo_original>
